<compile_context>
chip_gen: v7x
topology: tpu7x:2x2x1
jax: 0.10.0
libtpu: 0.0.40
codegen_flags: <defaults>
</compile_context>

<pallas_src>
import functools

import jax
import jax.numpy as jnp
from jax.experimental import pallas as pl
from jax.experimental.pallas import tpu as pltpu


# ---------------------------------------------------------------------------
# Fused kernel: one (Bt, C, HW) slab per grid step -> pool, excite, rescale.
# ---------------------------------------------------------------------------
def _se_fused_kernel(x_ref, w1t_ref, w2t_ref, o_ref):
    # x_ref/o_ref: (Bt, C, HW)   w1t_ref: (C, Cr) (1/HW folded)   w2t_ref: (Cr, C)
    x = x_ref[...]

    # Squeeze: spatial sum with f32 accumulation (the avg-pool's 1/HW is folded
    # into w1t, so no divide).  For f32 inputs the upcast is a no-op.
    pooled = jnp.sum(x.astype(jnp.float32), axis=2)                    # (Bt, C)

    # Excite: batched (Bt, C) @ (C, Cr) and (Bt, Cr) @ (Cr, C) on the MXU.
    hid = jnp.maximum(
        jnp.dot(pooled, w1t_ref[...], preferred_element_type=jnp.float32), 0.0)
    s = jax.nn.sigmoid(
        jnp.dot(hid, w2t_ref[...], preferred_element_type=jnp.float32))  # (Bt, C)

    # Scale: only the tiny gate is cast to x's dtype; store fused.
    o_ref[...] = (x * s.astype(x.dtype)[:, :, None]).astype(o_ref.dtype)


# ---------------------------------------------------------------------------
# Split path, pass 1: HW-tiled pool (MXU ones-column dot) + excite.
# Output block (1, C, 1) is resident across the trailing hw axis and doubles
# as the accumulator (init at h==0, excite applied in place at h==last).
# ---------------------------------------------------------------------------
def _se_pool_gate_kernel(x_ref, w1_ref, w2_ref, g_ref, *, hw_total):
    # x_ref: (1, C, HWt)   w1_ref: (Cr, C) (1/HW folded)   w2_ref: (C, Cr)
    h_idx = pl.program_id(1)
    n_hw = pl.num_programs(1)

    x = x_ref[0]                                                       # (C, HWt)
    hwt = x.shape[1]

    # Mask the ragged final tile (grid OOB lanes hold garbage) with a select so
    # NaN/Inf garbage cannot leak into the reduction, then pool on the MXU.
    lanes = jax.lax.broadcasted_iota(jnp.int32, x.shape, 1)
    xm = jnp.where(lanes < (hw_total - h_idx * hwt), x, 0)
    ones_col = jnp.ones((hwt, 1), x.dtype)
    psum = jnp.dot(xm, ones_col, preferred_element_type=jnp.float32)   # (C, 1)

    @pl.when(h_idx == 0)
    def _():
        g_ref[...] = jnp.zeros_like(g_ref)

    g_ref[...] += psum[None]                                           # (1, C, 1)

    @pl.when(h_idx == n_hw - 1)
    def _():
        pooled = g_ref[0]                                              # (C, 1)
        hid = jnp.maximum(
            jnp.dot(w1_ref[...], pooled, preferred_element_type=jnp.float32), 0.0)
        gate = jax.nn.sigmoid(
            jnp.dot(w2_ref[...], hid, preferred_element_type=jnp.float32))
        g_ref[...] = gate[None]


# ---------------------------------------------------------------------------
# Split path, pass 2: rescale by the per-(b, c) gate.
# ---------------------------------------------------------------------------
def _se_scale_kernel(x_ref, g_ref, o_ref):
    x = x_ref[...]                                                     # (1, C, HWt)
    g = g_ref[...]                                                     # (1, C, 1) f32
    o_ref[...] = (x * g.astype(x.dtype)).astype(o_ref.dtype)


# ---------------------------------------------------------------------------
# Generation-aware budgets.
# ---------------------------------------------------------------------------
def _budgets():
    """Returns (target block bytes, scoped-VMEM limit cap)."""
    try:
        vmem_cap = int(pltpu.get_tpu_info().vmem_capacity_bytes)
    except Exception:
        vmem_cap = None
    if vmem_cap is not None and vmem_cap > 96 * 1024 * 1024:
        # v5e / v6e class: 128 MiB physical VMEM -> bigger blocks, higher limit.
        return 6 * 1024 * 1024, 96 * 1024 * 1024
    # v7x class (64 MiB physical) or unknown backend: stay conservative.
    return 3 * 1024 * 1024, 40 * 1024 * 1024


# ---------------------------------------------------------------------------
# Wrappers.
# ---------------------------------------------------------------------------
def _se_fused(x_flat, w1, w2, inv_hw, tgt_blk, vmem_lim_cap):
    B, C, HW = x_flat.shape
    Cr = w1.shape[0]
    itemsize = x_flat.dtype.itemsize

    # Pad the spatial axis only when it is large and within ~3% of a lane
    # multiple; otherwise a full-extent (non-128-multiple) last block dim with
    # masked stores is cheaper than two extra XLA pad/slice passes.
    pad = (-HW) % 128
    do_pad = pad > 0 and HW >= 1024 and pad <= 0.03 * HW
    HWp = HW + pad if do_pad else HW
    if do_pad:
        x_flat = jnp.pad(x_flat, ((0, 0), (0, 0), (0, pad)))

    # Fold the average-pool's 1/HW into fc1 and pre-transpose for row-major dots.
    w1t = (w1.astype(jnp.float32) * inv_hw).T                          # (C, Cr)
    w2t = w2.astype(jnp.float32).T                                     # (Cr, C)

    # Divisor-free batch blocking: biggest Bt within the byte budget, but keep
    # ~min(B, 4) grid blocks so both v7x TCs get work and the pipeline has depth.
    per_batch_bytes = C * HWp * itemsize
    bt_cap = max(1, tgt_blk // per_batch_bytes)
    min_blocks = min(B, 4)
    bt_cap = min(bt_cap, max(1, B // min_blocks))
    Bt = int(max(1, min(bt_cap, B)))
    grid = (pl.cdiv(B, Bt),)

    # Scoped-VMEM estimate: double-buffered in + out blocks, the f32 pooled
    # temp for sub-32-bit inputs, resident weights, plus headroom.
    f32_temp = 4 if itemsize < 4 else 0
    need = Bt * C * HWp * (4 * itemsize + f32_temp) + 16 * C * Cr + (2 << 20)
    vmem_limit = int(min(vmem_lim_cap, max(16 << 20, need)))

    out = pl.pallas_call(
        _se_fused_kernel,
        out_shape=jax.ShapeDtypeStruct((B, C, HWp), x_flat.dtype),
        grid_spec=pltpu.PrefetchScalarGridSpec(
            num_scalar_prefetch=0,
            grid=grid,
            in_specs=[
                pl.BlockSpec((Bt, C, HWp), lambda b: (b, 0, 0)),
                # Constant index maps -> weight blocks stay resident across steps.
                pl.BlockSpec((C, Cr), lambda b: (0, 0)),
                pl.BlockSpec((Cr, C), lambda b: (0, 0)),
            ],
            out_specs=pl.BlockSpec((Bt, C, HWp), lambda b: (b, 0, 0)),
        ),
        compiler_params=pltpu.CompilerParams(
            dimension_semantics=("parallel",),
            vmem_limit_bytes=vmem_limit,
        ),
    )(x_flat, w1t, w2t)

    return out[:, :, :HW] if do_pad else out


def _se_split(x_flat, w1, w2, inv_hw, tgt_blk, vmem_lim_cap, split_hw_tile):
    B, C, HW = x_flat.shape
    Cr = w1.shape[0]
    itemsize = x_flat.dtype.itemsize

    if split_hw_tile is not None:
        HWt = int(split_hw_tile)
    else:
        HWt = max(128, (tgt_blk // (C * itemsize)) // 128 * 128)
    HWt = min(HWt, HW)
    n_hw = pl.cdiv(HW, HWt)
    grid = (B, n_hw)

    w1s = w1.astype(jnp.float32) * inv_hw                              # (Cr, C)
    w2f = w2.astype(jnp.float32)                                       # (C, Cr)

    block_bytes = C * HWt * itemsize
    vmem_limit = int(min(vmem_lim_cap,
                         max(16 << 20, 5 * block_bytes + (2 << 20))))

    # Pass 1: HW-tiled pooling + excite -> gate (B, C, 1) in f32.
    gate = pl.pallas_call(
        functools.partial(_se_pool_gate_kernel, hw_total=HW),
        out_shape=jax.ShapeDtypeStruct((B, C, 1), jnp.float32),
        grid_spec=pltpu.PrefetchScalarGridSpec(
            num_scalar_prefetch=0,
            grid=grid,
            in_specs=[
                pl.BlockSpec((1, C, HWt), lambda b, h: (b, 0, h)),
                pl.BlockSpec((Cr, C), lambda b, h: (0, 0)),
                pl.BlockSpec((C, Cr), lambda b, h: (0, 0)),
            ],
            out_specs=pl.BlockSpec((1, C, 1), lambda b, h: (b, 0, 0)),
        ),
        compiler_params=pltpu.CompilerParams(
            dimension_semantics=("parallel", "arbitrary"),
            vmem_limit_bytes=vmem_limit,
        ),
    )(x_flat, w1s, w2f)

    # Pass 2: rescale (one extra read of x vs. the fused path, but keeps blocks
    # small enough to double-buffer within v7x's 64 MiB VMEM).
    out = pl.pallas_call(
        _se_scale_kernel,
        out_shape=jax.ShapeDtypeStruct((B, C, HW), x_flat.dtype),
        grid_spec=pltpu.PrefetchScalarGridSpec(
            num_scalar_prefetch=0,
            grid=grid,
            in_specs=[
                pl.BlockSpec((1, C, HWt), lambda b, h: (b, 0, h)),
                pl.BlockSpec((1, C, 1), lambda b, h: (b, 0, 0)),
            ],
            out_specs=pl.BlockSpec((1, C, HWt), lambda b, h: (b, 0, h)),
        ),
        compiler_params=pltpu.CompilerParams(
            dimension_semantics=("parallel", "parallel"),
            vmem_limit_bytes=vmem_limit,
        ),
    )(x_flat, gate)

    return out


def se_layer(x, w1, w2, *, target_block_bytes=None, force_split=False,
             split_hw_tile=None):
    """SE forward.  x: (B, C, H, W) NCHW.  w1: (C//r, C).  w2: (C, C//r)."""
    B, C, H, W = x.shape
    HW = H * W
    itemsize = x.dtype.itemsize

    tgt_blk, vmem_lim_cap = _budgets()
    if target_block_bytes is not None:
        tgt_blk = int(target_block_bytes)

    inv_hw = 1.0 / HW
    x_flat = x.reshape(B, C, HW)                   # free metadata reshape

    # Fall back to the HW-tiled split path when a single batch's slab is too
    # big to block/pipeline well (sooner when B is too small to tile by batch).
    per_batch_bytes = C * HW * itemsize
    split_threshold = 2 * tgt_blk if B >= 4 else tgt_blk
    use_split = force_split or per_batch_bytes > split_threshold

    if use_split:
        out_flat = _se_split(x_flat, w1, w2, inv_hw, tgt_blk, vmem_lim_cap,
                             split_hw_tile)
    else:
        out_flat = _se_fused(x_flat, w1, w2, inv_hw, tgt_blk, vmem_lim_cap)
    return out_flat.reshape(B, C, H, W)


def se_layer_ref(x, w1, w2):
    # Pure-JAX reference mirroring the PyTorch forward.
    y = jnp.mean(x, axis=(2, 3))                    # (B, C)
    y = jnp.maximum(y @ w1.T, 0.0)                  # (B, C//r)
    y = jax.nn.sigmoid(y @ w2.T)                    # (B, C)
    return x * y[:, :, None, None]


if __name__ == "__main__":
    key = jax.random.PRNGKey(0)
    kx1, kx2, kx3, k1, k2 = jax.random.split(key, 5)

    # Module config: channel=32, reduction=16 -> hidden width 2.
    C, reduction = 32, 16
    Cr = C // reduction
    # nn.Linear(bias=False) weights, (out_features, in_features) layout.
    w1 = jax.random.normal(k1, (Cr, C), dtype=jnp.float32) * 0.1
    w2 = jax.random.normal(k2, (C, Cr), dtype=jnp.float32) * 0.1

    # Case 1: typical late-stage SE shape (HW=64, not a lane multiple) ->
    # fused path with an unpadded full-extent spatial block.
    x1 = jax.random.normal(kx1, (2, C, 8, 8), dtype=jnp.float32)
    o1 = jax.block_until_ready(se_layer(x1, w1, w2))
    assert o1.shape == x1.shape
    assert jnp.allclose(o1, se_layer_ref(x1, w1, w2), atol=2e-5, rtol=2e-5)

    # Case 2: odd batch -> divisor-free blocking with a ragged last batch block.
    x2 = jax.random.normal(kx2, (9, C, 8, 8), dtype=jnp.float32)
    o2 = jax.block_until_ready(se_layer(x2, w1, w2))
    assert jnp.allclose(o2, se_layer_ref(x2, w1, w2), atol=2e-5, rtol=2e-5)

    # Case 3: exercise the large-slab split path (HW-tiled MXU pool + scale)
    # with a ragged final spatial tile (HW=144, tile=128).
    x3 = jax.random.normal(kx3, (2, C, 12, 12), dtype=jnp.float32)
    o3 = jax.block_until_ready(
        se_layer(x3, w1, w2, force_split=True, split_hw_tile=128))
    assert jnp.allclose(o3, se_layer_ref(x3, w1, w2), atol=2e-5, rtol=2e-5)

    print("KERNEL_OK")
</pallas_src>

<mosaic_0001>
module attributes {stable_mosaic.version = 11 : i64} {
  func.func @_se_fused_kernel(%arg0: i32, %arg1: memref<1x32x64xf32, #tpu.memory_space<vmem>>, %arg2: memref<32x2xf32, #tpu.memory_space<vmem>>, %arg3: memref<2x32xf32, #tpu.memory_space<vmem>>, %arg4: memref<1x32x64xf32, #tpu.memory_space<vmem>>) attributes {dimension_semantics = [#tpu.dimension_semantics<parallel>], iteration_bounds = array<i64: 2>, scalar_prefetch = 0 : i64, scratch_operands = 0 : i64, tpu.core_type = #tpu.core_type<tc>, window_params = [{transform_indices = @transform_0, window_bounds = array<i64: 1, 32, 64>}, {pipeline_mode = #tpu.pipeline_mode<synchronous>, transform_indices = @transform_1, window_bounds = array<i64: 32, 2>}, {pipeline_mode = #tpu.pipeline_mode<synchronous>, transform_indices = @transform_2, window_bounds = array<i64: 2, 32>}, {transform_indices = @transform_3, window_bounds = array<i64: 1, 32, 64>}]} {
    %c0 = arith.constant 0 : index
    %c0_0 = arith.constant 0 : index
    %c0_1 = arith.constant 0 : index
    %0 = vector.load %arg1[%c0, %c0_0, %c0_1] : memref<1x32x64xf32, #tpu.memory_space<vmem>>, vector<1x32x64xf32>
    %cst = arith.constant dense<0.000000e+00> : vector<1x32xf32>
    %1 = vector.multi_reduction <add>, %0, %cst [2] : vector<1x32x64xf32> to vector<1x32xf32>
    %c0_2 = arith.constant 0 : index
    %c0_3 = arith.constant 0 : index
    %2 = vector.load %arg2[%c0_2, %c0_3] : memref<32x2xf32, #tpu.memory_space<vmem>>, vector<32x2xf32>
    %cst_4 = arith.constant dense<0.000000e+00> : vector<1x2xf32>
    %3 = tpu.matmul %1, %2, %cst_4 {dimension_numbers = #tpu.dot_dimension_numbers<[1], [0], [0], [1], [0, 0, 1, 1], [], []>} : vector<1x32xf32>, vector<32x2xf32>, vector<1x2xf32> -> vector<1x2xf32>
    %cst_5 = arith.constant 0.000000e+00 : f32
    %4 = vector.broadcast %cst_5 : f32 to vector<1x2xf32>
    %5 = arith.maximumf %3, %4 : vector<1x2xf32>
    %c0_6 = arith.constant 0 : index
    %c0_7 = arith.constant 0 : index
    %6 = vector.load %arg3[%c0_6, %c0_7] : memref<2x32xf32, #tpu.memory_space<vmem>>, vector<2x32xf32>
    %cst_8 = arith.constant dense<0.000000e+00> : vector<1x32xf32>
    %7 = tpu.matmul %5, %6, %cst_8 {dimension_numbers = #tpu.dot_dimension_numbers<[1], [0], [0], [1], [0, 0, 1, 1], [], []>} : vector<1x2xf32>, vector<2x32xf32>, vector<1x32xf32> -> vector<1x32xf32>
    %8 = arith.negf %7 : vector<1x32xf32>
    %9 = math.exp %8 : vector<1x32xf32>
    %cst_9 = arith.constant 1.000000e+00 : f32
    %10 = vector.broadcast %cst_9 : f32 to vector<1x32xf32>
    %11 = arith.addf %10, %9 : vector<1x32xf32>
    %12 = arith.divf %10, %11 : vector<1x32xf32>
    %13 = vector.shape_cast %12 : vector<1x32xf32> to vector<1x32x1xf32>
    %14 = vector.broadcast %13 : vector<1x32x1xf32> to vector<1x32x64xf32>
    %15 = arith.mulf %0, %14 : vector<1x32x64xf32>
    %c0_10 = arith.constant 0 : index
    %c0_11 = arith.constant 0 : index
    %c0_12 = arith.constant 0 : index
    %16 = vector.load %arg4[%c0_10, %c0_11, %c0_12] : memref<1x32x64xf32, #tpu.memory_space<vmem>>, vector<1x32x64xf32>
    tpu.vector_store %arg4[%c0_10, %c0_11, %c0_12], %15 {strides = array<i32>} : memref<1x32x64xf32, #tpu.memory_space<vmem>>, vector<1x32x64xf32>,
    return
  }
  func.func @transform_0(%arg0: i32) -> (i32, i32, i32) {
    %c0_i32 = arith.constant 0 : i32
    %c0_i32_0 = arith.constant 0 : i32
    %c0_i32_1 = arith.constant 0 : i32
    return %arg0, %c0_i32, %c0_i32_0 : i32, i32, i32
  }
  func.func @transform_1(%arg0: i32) -> (i32, i32) {
    %c0_i32 = arith.constant 0 : i32
    %c0_i32_0 = arith.constant 0 : i32
    %c0_i32_1 = arith.constant 0 : i32
    return %c0_i32, %c0_i32_0 : i32, i32
  }
  func.func @transform_2(%arg0: i32) -> (i32, i32) {
    %c0_i32 = arith.constant 0 : i32
    %c0_i32_0 = arith.constant 0 : i32
    %c0_i32_1 = arith.constant 0 : i32
    return %c0_i32, %c0_i32_0 : i32, i32
  }
  func.func @transform_3(%arg0: i32) -> (i32, i32, i32) {
    %c0_i32 = arith.constant 0 : i32
    %c0_i32_0 = arith.constant 0 : i32
    %c0_i32_1 = arith.constant 0 : i32
    return %arg0, %c0_i32, %c0_i32_0 : i32, i32, i32
  }
}

</mosaic_0001>

<llo_original>
// kernel: tpu_custom_call.1
$region0: #{tpu_custom_call.1}
  #allocation0 [shape = 'u32[]', space=smem, size = 0x4, offset = 0x4, fixed_abs, tag = 'smem constant byte address 0x4 - core index']
  #allocation1 [shape = 'u32[144,128]{1,0:T(1,128)}', space=vmem, size = 0x12000, scoped, tag = 'internal scratch']
  %s0 = inlined_call_operand.hbm [shape: f32[2,32,64], index: 0, kind: input, shape index: {}]
  %s1 = inlined_call_operand.vmem [shape: f32[32,2], index: 1, kind: input, shape index: {}]
  %s2 = inlined_call_operand.vmem [shape: f32[2,32], index: 2, kind: input, shape index: {}]
  %s3 = inlined_call_operand.hbm [shape: f32[2,32,64], index: 3, kind: output, shape index: {}]
  %s4 = sld [smem:[#allocation0]]
  $region49: #{tpu_custom_call.1} parent=0
    _
  %s6 = ssub.s32 1, %s4
  %s7 = scalar_select 0, %s6, %s4
  $region1: #{tpu_custom_call.1} parent=0
    #allocation2 [shape = 'u8[32768]{0}', space=vmem, size = 0x8000, scoped, tag = 'input window, operand 0']
    #allocation3 [shape = 's32[2]{0}', space=sflag, size = 0x8, scoped, tag = 'scoped memory for tpu_custom_call.1']
    #allocation4 [shape = 's32[2]{0}', space=sflag, size = 0x8, scoped, tag = 'scoped memory for tpu_custom_call.1']
    #allocation5 [shape = 'u8[32768]{0}', space=vmem, size = 0x8000, scoped, tag = 'output window, operand 0']
    %8 = vsyncpa [#allocation3], 0
    %s9 = scalar_lea.sflag [#allocation3], 1
    %10 = vsyncpa %s9, 0
    %11 = vsyncpa [#allocation4], 0
    %s12 = scalar_lea.sflag [#allocation4], 1
    %13 = vsyncpa %s12, 0
    loop: start=0, step=1, limit=4
    $region2: #{tpu_custom_call.1} parent=1 // loop_pre_header
      _
    $region3: #{tpu_custom_call.1} parent=1 // loop_header
      %s15 = sphi 0, %s19
      %p16 = scmp.ge.s32.totalorder %s15, 4
      %s25 = sphi 0, %s27
      %s28 = sphi 0, %s25
      %s29 = sphi 0, %s28
      %s45 = sphi 0, %s29
      %s49 = sphi 0, %s49
      %s51 = sphi 0, %s49
      %s52 = sphi 0, %s51
      %s66 = sphi 0, %s52
      %s70 = sphi 0, %s70
      %s72 = sphi 0, %s70
      %s73 = sphi 0, %s72
      %s87 = sphi 0, %s73
      %s93 = sphi 0, %s95
      %s96 = sphi 0, %s93
      %s97 = sphi 0, %s96
      %s113 = sphi 0, %s97
    $region4: #{tpu_custom_call.1} parent=1 // loop_header_branch
      %18 = sbr.rel (%p16) target = $region8
    $region5: #{tpu_custom_call.1} parent=1 // loop_body
      %s20 = ssub.s32 %s15, 1
      %s21 = ssub.s32 %s15, 2
      %s22 = sadd.s32 %s15, 1
      %s23 = ssub.s32 %s15, %s22
      %p24 = scmp.eq.s32.totalorder %s23, 0
      %s26 = sadd.s32 %s25, 1
      %s27 = scalar_select %p24, %s25, %s26
      %p30 = pneg %p24
      %p31 = scmp.eq.s32.totalorder %s15, 1
      %p32 = por %p30, %p31
      %p33 = scmp.ne.s32.totalorder %s25, %s28
      %p34 = scmp.eq.s32.totalorder %s15, 0
      %p35 = por %p33, %p34
      %p36 = scmp.ne.s32.totalorder %s25, %s28
      %p37 = scmp.eq.s32.totalorder %s20, 1
      %p38 = por %p36, %p37
      %p39 = scmp.ne.s32.totalorder %s28, %s29
      %p40 = scmp.eq.s32.totalorder %s20, 0
      %p41 = por %p39, %p40
      %p42 = scmp.ne.s32.totalorder %s28, %s29
      %p43 = scmp.eq.s32.totalorder %s21, 1
      %p44 = por %p42, %p43
      %p46 = scmp.ne.s32.totalorder %s29, %s45
      %p47 = scmp.eq.s32.totalorder %s21, 0
      %p48 = por %p46, %p47
      %s50 = sadd.s32 %s49, 1
      %p53 = scmp.eq.s32.totalorder %s15, 1
      %p54 = scmp.ne.s32.totalorder %s49, %s51
      %p55 = scmp.eq.s32.totalorder %s15, 0
      %p56 = por %p54, %p55
      %p57 = scmp.ne.s32.totalorder %s49, %s51
      %p58 = scmp.eq.s32.totalorder %s20, 1
      %p59 = por %p57, %p58
      %p60 = scmp.ne.s32.totalorder %s51, %s52
      %p61 = scmp.eq.s32.totalorder %s20, 0
      %p62 = por %p60, %p61
      %p63 = scmp.ne.s32.totalorder %s51, %s52
      %p64 = scmp.eq.s32.totalorder %s21, 1
      %p65 = por %p63, %p64
      %p67 = scmp.ne.s32.totalorder %s52, %s66
      %p68 = scmp.eq.s32.totalorder %s21, 0
      %p69 = por %p67, %p68
      %s71 = sadd.s32 %s70, 1
      %p74 = scmp.eq.s32.totalorder %s15, 1
      %p75 = scmp.ne.s32.totalorder %s70, %s72
      %p76 = scmp.eq.s32.totalorder %s15, 0
      %p77 = por %p75, %p76
      %p78 = scmp.ne.s32.totalorder %s70, %s72
      %p79 = scmp.eq.s32.totalorder %s20, 1
      %p80 = por %p78, %p79
      %p81 = scmp.ne.s32.totalorder %s72, %s73
      %p82 = scmp.eq.s32.totalorder %s20, 0
      %p83 = por %p81, %p82
      %p84 = scmp.ne.s32.totalorder %s72, %s73
      %p85 = scmp.eq.s32.totalorder %s21, 1
      %p86 = por %p84, %p85
      %p88 = scmp.ne.s32.totalorder %s73, %s87
      %p89 = scmp.eq.s32.totalorder %s21, 0
      %p90 = por %p88, %p89
      %s91 = ssub.s32 %s15, %s22
      %p92 = scmp.eq.s32.totalorder %s91, 0
      %s94 = sadd.s32 %s93, 1
      %s95 = scalar_select %p92, %s93, %s94
      %p98 = pneg %p92
      %p99 = scmp.eq.s32.totalorder %s15, 1
      %p100 = por %p98, %p99
      %p101 = scmp.ne.s32.totalorder %s93, %s96
      %p102 = scmp.eq.s32.totalorder %s15, 0
      %p103 = por %p101, %p102
      %p104 = scmp.ne.s32.totalorder %s93, %s96
      %p105 = scmp.eq.s32.totalorder %s20, 1
      %p106 = por %p104, %p105
      %p107 = scmp.ne.s32.totalorder %s96, %s97
      %p108 = scmp.eq.s32.totalorder %s20, 0
      %p109 = por %p107, %p108
      %p110 = scmp.ne.s32.totalorder %s96, %s97
      %p111 = scmp.eq.s32.totalorder %s21, 1
      %p112 = por %p110, %p111
      %p114 = scmp.ne.s32.totalorder %s97, %s113
      %p115 = scmp.eq.s32.totalorder %s21, 0
      %p116 = por %p114, %p115
      %p117 = scmp.le.s32.totalorder 1, %s15
      %p118 = scmp.lt.s32.totalorder %s15, 3
      %p119 = pnand %p117, %p118
      %p120 = pneg %p119
      // Predicated region
      $region9: #{tpu_custom_call.1} parent=5 // pred_check
        _
      $region10: #{tpu_custom_call.1} parent=5 // pred_check_branch
        %122 = sbr.rel (%p119) target = $region12
      $region11: #{tpu_custom_call.1} parent=5 // pred_region
        %s123 = ssub.s32 %s15, 1
        // Predicated region
        $region13: #{tpu_custom_call.1} parent=11 // pred_check
          %p124 = pneg %p62
        $region14: #{tpu_custom_call.1} parent=11 // pred_check_branch
          %126 = sbr.rel (%p124) target = $region16
        $region15: #{tpu_custom_call.1} parent=11 // pred_region
          _
        $region16: #{tpu_custom_call.1} parent=11 // pred_fallthru
          _
        // Predicated region
        $region17: #{tpu_custom_call.1} parent=11 // pred_check
          %p127 = pneg %p83
        $region18: #{tpu_custom_call.1} parent=11 // pred_check_branch
          %129 = sbr.rel (%p127) target = $region20
        $region19: #{tpu_custom_call.1} parent=11 // pred_region
          _
        $region20: #{tpu_custom_call.1} parent=11 // pred_fallthru
          _
      $region12: #{tpu_custom_call.1} parent=5 // pred_fallthru
        _
      %p130 = scmp.lt.s32.totalorder %s15, 2
      // Predicated region
      $region21: #{tpu_custom_call.1} parent=5 // pred_check
        %p131 = pneg %p130
      $region22: #{tpu_custom_call.1} parent=5 // pred_check_branch
        %133 = sbr.rel (%p131) target = $region24
      $region23: #{tpu_custom_call.1} parent=5 // pred_region
        // Predicated region
        $region25: #{tpu_custom_call.1} parent=23 // pred_check
          %p134 = pneg %p35
        $region26: #{tpu_custom_call.1} parent=23 // pred_check_branch
          %136 = sbr.rel (%p134) target = $region28
        $region27: #{tpu_custom_call.1} parent=23 // pred_region
          %s137 = sand.u32 %s25, 1
          %s138 = scalar_lea.sflag [#allocation3], %s137
          %s139 = sand.u32 %s25, 1
          %s140 = smul.addr %s139, 32
          %s141 = scalar_lea.vmem [#allocation2], %s140
          %s143 = ssub.s32 512, 512
          %144 = vsyncadd %s138, %s143
          %s145 = smul.addr %s15, 4
          %s146 = smul.addr %s145, 128
          %s147 = scalar_lea.hbm %s0, %s146
          %s148 = sshll.u32 %s141, 4
          %s149 = int_to_ptr.vmem [resolvable:$true] %s148
          %154 = dma.hbm_to_vmem [thread:$0]  %s147, 512, %s149, %s138, 128, 128, 8
        $region28: #{tpu_custom_call.1} parent=23 // pred_fallthru
          _
      $region24: #{tpu_custom_call.1} parent=5 // pred_fallthru
        _
      %p155 = scmp.le.s32.totalorder 1, %s15
      %p156 = scmp.lt.s32.totalorder %s15, 3
      %p157 = pnand %p155, %p156
      %p158 = pneg %p157
      // Predicated region
      $region29: #{tpu_custom_call.1} parent=5 // pred_check
        _
      $region30: #{tpu_custom_call.1} parent=5 // pred_check_branch
        %160 = sbr.rel (%p157) target = $region32
      $region31: #{tpu_custom_call.1} parent=5 // pred_region
        %s161 = ssub.s32 %s15, 1
        %s162 = sand.u32 %s28, 1
        %s163 = scalar_lea.sflag [#allocation3], %s162
        %s164 = sand.u32 %s28, 1
        %s165 = smul.addr %s164, 32
        %s166 = scalar_lea.vmem [#allocation2], %s165
        // Predicated region
        $region33: #{tpu_custom_call.1} parent=31 // pred_check
          %p167 = pneg %p41
        $region34: #{tpu_custom_call.1} parent=31 // pred_check_branch
          %169 = sbr.rel (%p167) target = $region36
        $region35: #{tpu_custom_call.1} parent=31 // pred_region
          %170 = dma.done %s163, 512
        $region36: #{tpu_custom_call.1} parent=31 // pred_fallthru
          _
        %s171 = sand.u32 %s28, 1
        %s172 = scalar_lea.sflag [#allocation3], %s171
        %s173 = sand.u32 %s28, 1
        %s174 = smul.addr %s173, 32
        %s175 = scalar_lea.vmem [#allocation2], %s174
        %p176 = pneg %p41
        %p177 = pneg %p38
        %p178 = pneg %p62
        %p179 = pneg %p59
        %p180 = pneg %p83
        %p181 = pneg %p80
        %p182 = pneg %p109
        %p183 = pneg %p106
        %s184 = sand.u32 %s96, 1
        %s185 = scalar_lea.sflag [#allocation4], %s184
        %s186 = sand.u32 %s96, 1
        %s187 = smul.addr %s186, 32
        %s188 = scalar_lea.vmem [#allocation5], %s187
        %v189 = vld [vmem:[%s166] sm:$0xff]
        %v190 = vld [vmem:[%s166 + $0x8] sm:$0xff]
        %v191 = vld [vmem:[%s166 + $0x10] sm:$0xff]
        %v192 = vld [vmem:[%s166 + $0x18] sm:$0xff]
        %vm193 = vcmask 523264
        %v194 = vsel %vm193, %v189, 0.0
        %195 = vadd.xlane.f32.xlu0 %v194
        %v196 = vpop.xlane.xlu0 %195
        %v197 = vsel %vm193, %v190, 0.0
        %198 = vadd.xlane.f32.xlu0 %v197
        %v199 = vpop.xlane.xlu0 %198
        %v200 = vsel %vm193, %v191, 0.0
        %201 = vadd.xlane.f32.xlu0 %v200
        %v202 = vpop.xlane.xlu0 %201
        %v203 = vsel %vm193, %v192, 0.0
        %204 = vadd.xlane.f32.xlu0 %v203
        %v205 = vpop.xlane.xlu0 %204
        %v206 = vld [vmem:[%s1] sm:$0xff]
        %v207 = vld [vmem:[%s1 + $0x8] sm:$0xff]
        %v208 = vld [vmem:[%s1 + $0x10] sm:$0xff]
        %v209 = vld [vmem:[%s1 + $0x18] sm:$0xff]
        %v214 = vlaneseq
        %v215 = vand.u32 %v214, 127
        %v216 = vlaneseq
        %v217 = vshrl.u32 %v216, 7
        %v218 = vsub.s32 %v215, %v217
        %v219 = vrot.slane %v196, %v218
        %v220 = vadd.s32 %v215, 4294967288
        %v221 = vlaneseq
        %v222 = vshrl.u32 %v221, 7
        %v223 = vsub.s32 %v220, %v222
        %v224 = vrot.slane %v199, %v223
        %vm225 = vcmask 130112
        %v226 = vsel %vm225, %v224, %v219
        %v227 = vadd.s32 %v215, 4294967280
        %v228 = vlaneseq
        %v229 = vshrl.u32 %v228, 7
        %v230 = vsub.s32 %v227, %v229
        %v231 = vrot.slane %v202, %v230
        %vm232 = vcmask 195712
        %v233 = vsel %vm232, %v231, %v226
        %v234 = vadd.s32 %v215, 4294967272
        %v235 = vlaneseq
        %v236 = vshrl.u32 %v235, 7
        %v237 = vsub.s32 %v234, %v236
        %v238 = vrot.slane %v205, %v237
        %vm239 = vcmask 261312
        %v240 = vsel %vm239, %v238, %v233
        %vm241 = vcmask 261120
        %v242 = vsel %vm241, %v240, 0
        %244 = vmatprep.subr.mxu0 0.0
        %245 = vmatpush1.msra.mxu0 %v206
        %246 = vmatprep.subr.mxu0 0.0
        %247 = vmatpush1.msra.mxu0 %v207
        %248 = vmatprep.subr.mxu0 0.0
        %249 = vmatpush1.msra.mxu0 %v208
        %250 = vmatprep.subr.mxu0 0.0
        %251 = vmatpush1.msra.mxu0 %v209
        %252 = vmatprep.subr.mxu0 0.0
        %253 = vmatpush1.msra.mxu0 0.0
        %254 = vmatprep.subr.mxu0 0.0
        %255 = vmatpush1.msra.mxu0 0.0
        %256 = vmatprep.subr.mxu0 0.0
        %257 = vmatpush1.msra.mxu0 0.0
        %258 = vmatprep.subr.mxu0 0.0
        %259 = vmatpush1.msra.mxu0 0.0
        %260 = vmatprep.subr.mxu0 0.0
        %261 = vmatpush1.msra.mxu0 0.0
        %262 = vmatprep.subr.mxu0 0.0
        %263 = vmatpush1.msra.mxu0 0.0
        %264 = vmatprep.subr.mxu0 0.0
        %265 = vmatpush1.msra.mxu0 0.0
        %266 = vmatprep.subr.mxu0 0.0
        %267 = vmatpush1.msra.mxu0 0.0
        %268 = vmatprep.subr.mxu0 0.0
        %269 = vmatpush1.msra.mxu0 0.0
        %270 = vmatprep.subr.mxu0 0.0
        %271 = vmatpush1.msra.mxu0 0.0
        %272 = vmatprep.subr.mxu0 0.0
        %273 = vmatpush1.msra.mxu0 0.0
        %274 = vmatprep.subr.mxu0 0.0
        %275 = vmatpush1.msra.mxu0 0.0
        %276 = vmatprep.subr.mxu0 0.0
        %277 = vmatpush1.msra.mxu0 0.0
        %278 = vmatprep.subr.mxu0 0.0
        %279 = vmatpush1.msra.mxu0 0.0
        %280 = vmatprep.subr.mxu0 0.0
        %281 = vmatpush1.msra.mxu0 0.0
        %282 = vmatprep.subr.mxu0 0.0
        %283 = vmatpush1.msra.mxu0 0.0
        %284 = vmatprep.subr.mxu0 0.0
        %285 = vmatpush1.msra.mxu0 0.0
        %286 = vmatprep.subr.mxu0 0.0
        %287 = vmatpush1.msra.mxu0 0.0
        %288 = vmatprep.subr.mxu0 0.0
        %289 = vmatpush1.msra.mxu0 0.0
        %290 = vmatprep.subr.mxu0 0.0
        %291 = vmatpush1.msra.mxu0 0.0
        %292 = vmatprep.subr.mxu0 0.0
        %293 = vmatpush1.msra.mxu0 0.0
        %294 = vmatprep.subr.mxu0 0.0
        %295 = vmatpush1.msra.mxu0 0.0
        %296 = vmatprep.subr.mxu0 0.0
        %297 = vmatpush1.msra.mxu0 0.0
        %298 = vmatprep.subr.mxu0 0.0
        %299 = vmatpush1.msra.mxu0 0.0
        %300 = vmatprep.subr.mxu0 0.0
        %301 = vmatpush1.msra.mxu0 0.0
        %302 = vmatprep.subr.mxu0 0.0
        %303 = vmatpush1.msra.mxu0 0.0
        %304 = vmatprep.subr.mxu0 0.0
        %305 = vmatpush1.msra.mxu0 0.0
        %306 = vmatprep.subr.mxu0 0.0
        %307 = vmatpush1.msra.mxu0 0.0
        %308 = vmatprep.mubr.f32.mxu0 0.0
        %309 = vmatmul.mubr.f32.gmra.mrb[0].mxu0 %v242
        %v310 = vpop.f32.mrb[0].mxu0
        %v311 = vadd.f32 0.0, %v310
        %v312 = vpop.f32.mrb[0].mxu0
        %313 = vdwg.mxu0
        %v314 = vmax.f32 %v311, 0.0
        %v315 = vld [vmem:[%s2] sm:$0x3]
        %vm316 = vcmask 15360
        %v318 = vsel %vm316, %v314, 0
        %vm320 = vcmask 1041408
        %v322 = vsel %vm320, %v315, 0
        %324 = vmatprep.subr.mxu0 0.0
        %325 = vmatpush1.msra.mxu0 %v322
        %326 = vmatprep.subr.mxu0 0.0
        %327 = vmatpush1.msra.mxu0 0.0
        %328 = vmatprep.subr.mxu0 0.0
        %329 = vmatpush1.msra.mxu0 0.0
        %330 = vmatprep.subr.mxu0 0.0
        %331 = vmatpush1.msra.mxu0 0.0
        %332 = vmatprep.subr.mxu0 0.0
        %333 = vmatpush1.msra.mxu0 0.0
        %334 = vmatprep.subr.mxu0 0.0
        %335 = vmatpush1.msra.mxu0 0.0
        %336 = vmatprep.subr.mxu0 0.0
        %337 = vmatpush1.msra.mxu0 0.0
        %338 = vmatprep.subr.mxu0 0.0
        %339 = vmatpush1.msra.mxu0 0.0
        %340 = vmatprep.subr.mxu0 0.0
        %341 = vmatpush1.msra.mxu0 0.0
        %342 = vmatprep.subr.mxu0 0.0
        %343 = vmatpush1.msra.mxu0 0.0
        %344 = vmatprep.subr.mxu0 0.0
        %345 = vmatpush1.msra.mxu0 0.0
        %346 = vmatprep.subr.mxu0 0.0
        %347 = vmatpush1.msra.mxu0 0.0
        %348 = vmatprep.subr.mxu0 0.0
        %349 = vmatpush1.msra.mxu0 0.0
        %350 = vmatprep.subr.mxu0 0.0
        %351 = vmatpush1.msra.mxu0 0.0
        %352 = vmatprep.subr.mxu0 0.0
        %353 = vmatpush1.msra.mxu0 0.0
        %354 = vmatprep.subr.mxu0 0.0
        %355 = vmatpush1.msra.mxu0 0.0
        %356 = vmatprep.subr.mxu0 0.0
        %357 = vmatpush1.msra.mxu0 0.0
        %358 = vmatprep.subr.mxu0 0.0
        %359 = vmatpush1.msra.mxu0 0.0
        %360 = vmatprep.subr.mxu0 0.0
        %361 = vmatpush1.msra.mxu0 0.0
        %362 = vmatprep.subr.mxu0 0.0
        %363 = vmatpush1.msra.mxu0 0.0
        %364 = vmatprep.subr.mxu0 0.0
        %365 = vmatpush1.msra.mxu0 0.0
        %366 = vmatprep.subr.mxu0 0.0
        %367 = vmatpush1.msra.mxu0 0.0
        %368 = vmatprep.subr.mxu0 0.0
        %369 = vmatpush1.msra.mxu0 0.0
        %370 = vmatprep.subr.mxu0 0.0
        %371 = vmatpush1.msra.mxu0 0.0
        %372 = vmatprep.subr.mxu0 0.0
        %373 = vmatpush1.msra.mxu0 0.0
        %374 = vmatprep.subr.mxu0 0.0
        %375 = vmatpush1.msra.mxu0 0.0
        %376 = vmatprep.subr.mxu0 0.0
        %377 = vmatpush1.msra.mxu0 0.0
        %378 = vmatprep.subr.mxu0 0.0
        %379 = vmatpush1.msra.mxu0 0.0
        %380 = vmatprep.subr.mxu0 0.0
        %381 = vmatpush1.msra.mxu0 0.0
        %382 = vmatprep.subr.mxu0 0.0
        %383 = vmatpush1.msra.mxu0 0.0
        %384 = vmatprep.subr.mxu0 0.0
        %385 = vmatpush1.msra.mxu0 0.0
        %386 = vmatprep.subr.mxu0 0.0
        %387 = vmatpush1.msra.mxu0 0.0
        %388 = vmatprep.mubr.f32.mxu0 0.0
        %389 = vmatmul.mubr.f32.gmra.mrb[0].mxu0 %v318
        %v390 = vpop.f32.mrb[0].mxu0
        %v391 = vadd.f32 0.0, %v390
        %v392 = vpop.f32.mrb[0].mxu0
        %393 = vdwg.mxu0
        %v394 = vxor.u32 %v391, 2147483648
        %v395 = vmul.f32 %v394, 1.442695
        %v396 = vpow.pop %v395
        %v397 = vadd.f32 %v396, 1.0
        %v398 = vrcp.pop %v397
        %v399 = vmul.f32 1.0, %v398
        %v400 = vlaneseq
        %v401 = vshrl.u32 %v400, 7
        %v402 = vsub.s32 0, %v401
        %v403 = vrot.slane %v399, %v402
        %405 = vbcast.lane.b32.xlu0 %v403, 256
        %v406 = vpop.permute.xlu0 %405
        %s408 = sor.u32 256, 8
        %409 = vbcast.lane.b32.xlu0 %v403, %s408
        %v410 = vpop.permute.xlu0 %409
        %s412 = sor.u32 256, 16
        %413 = vbcast.lane.b32.xlu0 %v403, %s412
        %v414 = vpop.permute.xlu0 %413
        %s416 = sor.u32 256, 24
        %417 = vbcast.lane.b32.xlu0 %v403, %s416
        %v418 = vpop.permute.xlu0 %417
        %v419 = vmul.f32 %v189, %v406
        %v420 = vmul.f32 %v190, %v410
        %v421 = vmul.f32 %v191, %v414
        %v422 = vmul.f32 %v192, %v418
        %423 = vst.msk [vmem:[%s188] sm:$0xff] %vm193, %v419
        %424 = vst.msk [vmem:[%s188 + $0x8] sm:$0xff] %vm193, %v420
        %425 = vst.msk [vmem:[%s188 + $0x10] sm:$0xff] %vm193, %v421
        %426 = vst.msk [vmem:[%s188 + $0x18] sm:$0xff] %vm193, %v422
        %s427 = sand.u32 %s96, 1
        %s428 = scalar_lea.sflag [#allocation4], %s427
        %s429 = sand.u32 %s96, 1
        %s430 = smul.addr %s429, 32
        %s431 = scalar_lea.vmem [#allocation5], %s430
        // Predicated region
        $region37: #{tpu_custom_call.1} parent=31 // pred_check
          %p432 = pneg %p106
        $region38: #{tpu_custom_call.1} parent=31 // pred_check_branch
          %434 = sbr.rel (%p432) target = $region40
        $region39: #{tpu_custom_call.1} parent=31 // pred_region
          %s436 = ssub.s32 512, 512
          %437 = vsyncadd %s428, %s436
          %s438 = smul.addr %s20, 4
          %s439 = smul.addr %s438, 128
          %s440 = scalar_lea.hbm %s3, %s439
          %s441 = sshll.u32 %s431, 4
          %s442 = int_to_ptr.vmem [resolvable:$true] %s441
          %447 = dma.vmem_to_hbm [thread:$0]  %s442, 512, %s440, %s428, 128, 128, 8
        $region40: #{tpu_custom_call.1} parent=31 // pred_fallthru
          _
      $region32: #{tpu_custom_call.1} parent=5 // pred_fallthru
        _
      %p448 = scmp.le.s32.totalorder 2, %s15
      // Predicated region
      $region41: #{tpu_custom_call.1} parent=5 // pred_check
        %p449 = pneg %p448
      $region42: #{tpu_custom_call.1} parent=5 // pred_check_branch
        %451 = sbr.rel (%p449) target = $region44
      $region43: #{tpu_custom_call.1} parent=5 // pred_region
        %s452 = ssub.s32 %s15, 2
        // Predicated region
        $region45: #{tpu_custom_call.1} parent=43 // pred_check
          %p453 = pneg %p112
        $region46: #{tpu_custom_call.1} parent=43 // pred_check_branch
          %455 = sbr.rel (%p453) target = $region48
        $region47: #{tpu_custom_call.1} parent=43 // pred_region
          %s456 = sand.u32 %s97, 1
          %s457 = scalar_lea.sflag [#allocation4], %s456
          %s458 = sand.u32 %s97, 1
          %s459 = smul.addr %s458, 32
          %s460 = scalar_lea.vmem [#allocation5], %s459
          %461 = dma.done %s457, 512
        $region48: #{tpu_custom_call.1} parent=43 // pred_fallthru
          _
      $region44: #{tpu_custom_call.1} parent=5 // pred_fallthru
        _
    $region6: #{tpu_custom_call.1} parent=1 // loop_footer
      %s19 = sadd.s32 1, %s15
    $region7: #{tpu_custom_call.1} parent=1 // loop_footer_branch
      %14 = sbr.rel target = $region3
    $region8: #{tpu_custom_call.1} parent=1 // loop_exit
      _
    %462 = vsyncpa [#allocation3], 1
    %s463 = scalar_lea.sflag [#allocation3], 1
    %464 = vsyncpa %s463, 1
    %465 = vsyncpa [#allocation4], 1
    %s466 = scalar_lea.sflag [#allocation4], 1
    %467 = vsyncpa %s466, 1

</llo_original>
